<compile_context>
chip_gen: v7x
topology: tpu7x:2x2x1
jax: 0.10.0
libtpu: 0.0.40
codegen_flags: <defaults>
</compile_context>

<pallas_src>
import functools

import jax
import jax.numpy as jnp
from jax.experimental import pallas as pl
from jax.experimental.pallas import tpu as pltpu

_SUBLANE = 8
_LANE = 128
_MIN_GRID_STEPS = 8  # enough steps to hide DMA and feed both v7x TCs


def _vmem_capacity_bytes() -> int:
    try:
        info = pltpu.get_tpu_info()
        cap = getattr(info, "vmem_capacity_bytes", None)
        if cap:
            return int(cap)
    except Exception:
        pass
    return 64 * 1024 * 1024  # conservative (v7x per-TC)


def _budget_and_vmem_limit():
    """(input-block element budget, vmem_limit_bytes) per chip generation."""
    cap = _vmem_capacity_bytes()
    if cap >= 128 * 1024 * 1024:          # v5e / v6e: 128 MiB physical VMEM
        return 2 * 1024 * 1024, 64 * 1024 * 1024      # 8 MiB f32 block
    # v7x (64 MiB per TC) or unknown: smaller block, leave headroom for the
    # double-buffered input plus the block-sized f32 temporaries (e, x*e).
    return 1 * 1024 * 1024, min(48 * 1024 * 1024, (cap * 3) // 4)


def _cdiv(a: int, b: int) -> int:
    return -(-a // b)


def _choose_tiles(b: int, c: int, hw: int, budget_elems: int):
    """Pick (channel tile, spatial tile) for the (1, tc, thw) input block."""
    # Prefer no spatial tiling; only tile HW when even an 8-channel slab of
    # the full spatial extent would blow the budget.
    if _SUBLANE * hw <= budget_elems:
        thw = hw
    else:
        thw = max(_LANE, ((budget_elems // _SUBLANE) // _LANE) * _LANE)

    tc = max(_SUBLANE, ((budget_elems // thw) // _SUBLANE) * _SUBLANE)
    tc = min(tc, c)

    # Keep enough grid steps for software pipelining / megacore sharding.
    hw_steps = _cdiv(hw, thw)
    while tc > _SUBLANE and b * _cdiv(c, tc) * hw_steps < _MIN_GRID_STEPS:
        new_tc = max(_SUBLANE, ((tc // 2) // _SUBLANE) * _SUBLANE)
        if new_tc >= tc:
            new_tc = tc - _SUBLANE
        tc = max(_SUBLANE, new_tc)
    return tc, thw


def _soft_pool_kernel(x_ref, o_ref, m_acc, num_acc, den_acc, *,
                      beta: float, hw: int, thw: int,
                      use_exp: bool, mask_hw: bool):
    # x_ref block: (1, tc, thw)   spatial on lanes, channels on sublanes.
    # o_ref block: (1, tc, 1)     written once, on the last HW step.
    k = pl.program_id(2)

    @pl.when(k == 0)
    def _init():
        m_acc[...] = jnp.full(m_acc.shape, -jnp.inf, jnp.float32)
        num_acc[...] = jnp.zeros(num_acc.shape, jnp.float32)
        den_acc[...] = jnp.zeros(den_acc.shape, jnp.float32)

    x = x_ref[0].astype(jnp.float32)                    # (tc, thw)
    # TODO(synk): for bf16 inputs the max pass could stay in bf16 to halve
    # VMEM-load traffic; kept in f32 here for simplicity/accuracy.

    if mask_hw:
        # Last HW block is partial: padded lanes contain garbage, mask them.
        idx = jax.lax.broadcasted_iota(jnp.int32, x.shape, 1)
        valid = (k * thw + idx) < hw
    else:
        valid = None

    if use_exp:
        # beta > 0, so max(beta*x) == beta*max(x): no full-tile `scaled` temp.
        xm = x if valid is None else jnp.where(valid, x, -jnp.inf)
        m_local = jnp.max(xm, axis=-1, keepdims=True) * jnp.float32(beta)
        m_prev = m_acc[...]
        m_new = jnp.maximum(m_prev, m_local)
        scale = jnp.exp(m_prev - m_new)                 # 0 on the first step
        e = jnp.exp(x * jnp.float32(beta) - m_new)      # (tc, thw)
        if valid is not None:
            e = jnp.where(valid, e, 0.0)
            x = jnp.where(valid, x, 0.0)                # keep 0*0, never nan
        num_acc[...] = scale * num_acc[...] + jnp.sum(x * e, axis=-1,
                                                      keepdims=True)
        den_acc[...] = scale * den_acc[...] + jnp.sum(e, axis=-1,
                                                      keepdims=True)
        m_acc[...] = m_new
    else:
        # beta == 0: uniform softmax => plain mean over the spatial extent.
        if valid is None:
            num_acc[...] = num_acc[...] + jnp.sum(x, axis=-1, keepdims=True)
            den_acc[...] = den_acc[...] + jnp.float32(thw)
        else:
            vf = valid.astype(jnp.float32)
            xz = jnp.where(valid, x, 0.0)
            num_acc[...] = num_acc[...] + jnp.sum(xz, axis=-1, keepdims=True)
            den_acc[...] = den_acc[...] + jnp.sum(vf, axis=-1, keepdims=True)

    @pl.when(k == pl.num_programs(2) - 1)
    def _finish():
        o_ref[0] = (num_acc[...] / den_acc[...]).astype(o_ref.dtype)


def global_soft_pool_2d(x: jax.Array, beta: float = 1.0, *,
                        tile_budget_elems: int | None = None) -> jax.Array:
    """Pallas implementation of GlobalSoftPool2d.forward.

    Args:
      x: (B, C, H, W) array (NCHW, matching the PyTorch module).
      beta: softmax temperature (clamped to >= 0, matching the module).
      tile_budget_elems: optional override of the per-block element budget
        (exposed mainly so tests can force the tiled / masked code paths).

    Returns:
      (B, C) array, same dtype as x.
    """
    beta = float(beta)
    if beta < 0.0:
        beta = 0.0
    # TODO(synk): if beta must vary per call without recompiles, pass it as a
    # scalar-prefetch / SMEM operand instead of baking it at trace time.

    b, c, h, w = x.shape
    hw = h * w
    x_flat = x.reshape(b, c, hw)

    budget, vmem_limit = _budget_and_vmem_limit()
    if tile_budget_elems is not None:
        budget = int(tile_budget_elems)

    tc, thw = _choose_tiles(b, c, hw, budget)
    grid = (b, _cdiv(c, tc), _cdiv(hw, thw))
    mask_hw = (hw % thw) != 0
    use_exp = beta != 0.0

    kernel = functools.partial(_soft_pool_kernel, beta=beta, hw=hw, thw=thw,
                               use_exp=use_exp, mask_hw=mask_hw)

    itemsize = jnp.dtype(x.dtype).itemsize
    cost = pl.CostEstimate(
        flops=int(5 * b * c * hw),
        transcendentals=int(b * c * hw) if use_exp else 0,
        bytes_accessed=int(b * c * hw * itemsize + b * c * itemsize),
    )

    out3 = pl.pallas_call(
        kernel,
        out_shape=jax.ShapeDtypeStruct((b, c, 1), x.dtype),
        grid_spec=pltpu.PrefetchScalarGridSpec(
            num_scalar_prefetch=0,
            grid=grid,
            in_specs=[pl.BlockSpec((1, tc, thw), lambda i, j, k: (i, j, k))],
            out_specs=pl.BlockSpec((1, tc, 1), lambda i, j, k: (i, j, 0)),
            scratch_shapes=[
                pltpu.VMEM((tc, 1), jnp.float32),   # running max
                pltpu.VMEM((tc, 1), jnp.float32),   # running numerator
                pltpu.VMEM((tc, 1), jnp.float32),   # running denominator
            ],
        ),
        compiler_params=pltpu.CompilerParams(
            dimension_semantics=("parallel", "parallel", "arbitrary"),
            vmem_limit_bytes=int(vmem_limit),
        ),
        cost_estimate=cost,
    )(x_flat)
    return out3.reshape(b, c)


def _reference(x: jax.Array, beta: float = 1.0) -> jax.Array:
    # Pure-JAX reference mirroring the PyTorch forward.
    if beta < 0:
        beta = 0.0
    b, c, h, w = x.shape
    data = x.reshape(b, c, h * w).astype(jnp.float32)
    prob = jax.nn.softmax(data * beta, axis=-1)
    y = (data * prob).sum(-1)
    return y.astype(x.dtype)


if __name__ == "__main__":
    key = jax.random.PRNGKey(0)
    k1, k2, k3, k4 = jax.random.split(key, 4)

    # Case 1: HW = 256 (multiple of 128), tiny C -> single-step reduction.
    x1 = jax.random.normal(k1, (2, 4, 16, 16), dtype=jnp.float32)
    y1 = jax.block_until_ready(global_soft_pool_2d(x1, beta=1.0))
    y1_ref = _reference(x1, beta=1.0)
    assert y1.shape == (2, 4), y1.shape
    assert jnp.allclose(y1, y1_ref, atol=1e-5, rtol=1e-5), (y1, y1_ref)

    # Case 2: HW = 49 (NOT a multiple of 128) routed through the same
    # spatial-on-lanes kernel (full-HW block) -> verifies Mosaic lane masking
    # in the max/sum reductions, and exercises channel tiling (C=256).
    x2 = jax.random.normal(k2, (2, 256, 7, 7), dtype=jnp.float32)
    y2 = jax.block_until_ready(global_soft_pool_2d(x2, beta=2.0))
    y2_ref = _reference(x2, beta=2.0)
    assert y2.shape == (2, 256), y2.shape
    assert jnp.allclose(y2, y2_ref, atol=1e-5, rtol=1e-5), (y2, y2_ref)

    # Case 3: force the online-softmax HW-tiled path with a ragged last block
    # (hw=400, thw=128 -> 4 spatial steps, last one masked).
    x3 = jax.random.normal(k3, (2, 8, 20, 20), dtype=jnp.float32)
    y3 = jax.block_until_ready(
        global_soft_pool_2d(x3, beta=0.7, tile_budget_elems=1024))
    y3_ref = _reference(x3, beta=0.7)
    assert y3.shape == (2, 8), y3.shape
    assert jnp.allclose(y3, y3_ref, atol=1e-5, rtol=1e-5), (y3, y3_ref)

    # Case 4: beta == 0 fast path (uniform softmax == mean, no exp).
    x4 = jax.random.normal(k4, (1, 8, 4, 4), dtype=jnp.float32)
    y4 = jax.block_until_ready(global_soft_pool_2d(x4, beta=0.0))
    y4_ref = _reference(x4, beta=0.0)
    assert y4.shape == (1, 8), y4.shape
    assert jnp.allclose(y4, y4_ref, atol=1e-5, rtol=1e-5), (y4, y4_ref)

    print("KERNEL_OK")
</pallas_src>

<mosaic_0001>
module attributes {stable_mosaic.version = 11 : i64} {
  func.func @_soft_pool_kernel(%arg0: i32, %arg1: i32, %arg2: i32, %arg3: memref<1x4x256xf32, #tpu.memory_space<vmem>>, %arg4: memref<1x4x1xf32, #tpu.memory_space<vmem>>, %arg5: memref<4x1xf32, #tpu.memory_space<vmem>>, %arg6: memref<4x1xf32, #tpu.memory_space<vmem>>, %arg7: memref<4x1xf32, #tpu.memory_space<vmem>>) attributes {dimension_semantics = [#tpu.dimension_semantics<parallel>, #tpu.dimension_semantics<parallel>, #tpu.dimension_semantics<arbitrary>], iteration_bounds = array<i64: 2, 1, 1>, scalar_prefetch = 0 : i64, scratch_operands = 3 : i64, tpu.core_type = #tpu.core_type<tc>, window_params = [{transform_indices = @transform_0, window_bounds = array<i64: 1, 4, 256>}, {transform_indices = @transform_1, window_bounds = array<i64: 1, 4, 1>}]} {
    %c0_i32 = arith.constant 0 : i32
    %0 = arith.cmpi eq, %arg2, %c0_i32 : i32
    %1 = arith.extui %0 : i1 to i32
    %c0_i32_0 = arith.constant 0 : i32
    %2 = arith.cmpi ne, %1, %c0_i32_0 : i32
    scf.if %2 {
      %cst_21 = arith.constant 0xFF800000 : f32
      %35 = vector.broadcast %cst_21 : f32 to vector<4x1xf32>
      %c0_22 = arith.constant 0 : index
      %c0_23 = arith.constant 0 : index
      %36 = vector.load %arg5[%c0_22, %c0_23] : memref<4x1xf32, #tpu.memory_space<vmem>>, vector<4x1xf32>
      tpu.vector_store %arg5[%c0_22, %c0_23], %35 {strides = array<i32>} : memref<4x1xf32, #tpu.memory_space<vmem>>, vector<4x1xf32>,
      %cst_24 = arith.constant 0.000000e+00 : f32
      %37 = vector.broadcast %cst_24 : f32 to vector<4x1xf32>
      %c0_25 = arith.constant 0 : index
      %c0_26 = arith.constant 0 : index
      %38 = vector.load %arg6[%c0_25, %c0_26] : memref<4x1xf32, #tpu.memory_space<vmem>>, vector<4x1xf32>
      tpu.vector_store %arg6[%c0_25, %c0_26], %37 {strides = array<i32>} : memref<4x1xf32, #tpu.memory_space<vmem>>, vector<4x1xf32>,
      %cst_27 = arith.constant 0.000000e+00 : f32
      %39 = vector.broadcast %cst_27 : f32 to vector<4x1xf32>
      %c0_28 = arith.constant 0 : index
      %c0_29 = arith.constant 0 : index
      %40 = vector.load %arg7[%c0_28, %c0_29] : memref<4x1xf32, #tpu.memory_space<vmem>>, vector<4x1xf32>
      tpu.vector_store %arg7[%c0_28, %c0_29], %39 {strides = array<i32>} : memref<4x1xf32, #tpu.memory_space<vmem>>, vector<4x1xf32>,
    } else {
    }
    %c0 = arith.constant 0 : index
    %c0_1 = arith.constant 0 : index
    %c0_2 = arith.constant 0 : index
    %3 = vector.load %arg3[%c0, %c0_1, %c0_2] : memref<1x4x256xf32, #tpu.memory_space<vmem>>, vector<1x4x256xf32>
    %4 = vector.shape_cast %3 : vector<1x4x256xf32> to vector<4x256xf32>
    %cst = arith.constant dense<0xFF800000> : vector<4xf32>
    %5 = vector.multi_reduction <maximumf>, %4, %cst [1] : vector<4x256xf32> to vector<4xf32>
    %6 = vector.shape_cast %5 : vector<4xf32> to vector<4x1xf32>
    %cst_3 = arith.constant 1.000000e+00 : f32
    %7 = vector.broadcast %cst_3 : f32 to vector<4x1xf32>
    %8 = arith.mulf %6, %7 : vector<4x1xf32>
    %c0_4 = arith.constant 0 : index
    %c0_5 = arith.constant 0 : index
    %9 = vector.load %arg5[%c0_4, %c0_5] : memref<4x1xf32, #tpu.memory_space<vmem>>, vector<4x1xf32>
    %10 = arith.maximumf %9, %8 : vector<4x1xf32>
    %11 = arith.subf %9, %10 : vector<4x1xf32>
    %12 = math.exp %11 : vector<4x1xf32>
    %cst_6 = arith.constant 1.000000e+00 : f32
    %13 = vector.broadcast %cst_6 : f32 to vector<4x256xf32>
    %14 = arith.mulf %4, %13 : vector<4x256xf32>
    %15 = vector.broadcast %10 : vector<4x1xf32> to vector<4x256xf32>
    %16 = arith.subf %14, %15 : vector<4x256xf32>
    %17 = math.exp %16 : vector<4x256xf32>
    %c0_7 = arith.constant 0 : index
    %c0_8 = arith.constant 0 : index
    %18 = vector.load %arg6[%c0_7, %c0_8] : memref<4x1xf32, #tpu.memory_space<vmem>>, vector<4x1xf32>
    %19 = arith.mulf %12, %18 : vector<4x1xf32>
    %20 = arith.mulf %4, %17 : vector<4x256xf32>
    %cst_9 = arith.constant dense<0.000000e+00> : vector<4xf32>
    %21 = vector.multi_reduction <add>, %20, %cst_9 [1] : vector<4x256xf32> to vector<4xf32>
    %22 = vector.shape_cast %21 : vector<4xf32> to vector<4x1xf32>
    %23 = arith.addf %19, %22 : vector<4x1xf32>
    %c0_10 = arith.constant 0 : index
    %c0_11 = arith.constant 0 : index
    %24 = vector.load %arg6[%c0_10, %c0_11] : memref<4x1xf32, #tpu.memory_space<vmem>>, vector<4x1xf32>
    tpu.vector_store %arg6[%c0_10, %c0_11], %23 {strides = array<i32>} : memref<4x1xf32, #tpu.memory_space<vmem>>, vector<4x1xf32>,
    %c0_12 = arith.constant 0 : index
    %c0_13 = arith.constant 0 : index
    %25 = vector.load %arg7[%c0_12, %c0_13] : memref<4x1xf32, #tpu.memory_space<vmem>>, vector<4x1xf32>
    %26 = arith.mulf %12, %25 : vector<4x1xf32>
    %cst_14 = arith.constant dense<0.000000e+00> : vector<4xf32>
    %27 = vector.multi_reduction <add>, %17, %cst_14 [1] : vector<4x256xf32> to vector<4xf32>
    %28 = vector.shape_cast %27 : vector<4xf32> to vector<4x1xf32>
    %29 = arith.addf %26, %28 : vector<4x1xf32>
    %c0_15 = arith.constant 0 : index
    %c0_16 = arith.constant 0 : index
    %30 = vector.load %arg7[%c0_15, %c0_16] : memref<4x1xf32, #tpu.memory_space<vmem>>, vector<4x1xf32>
    tpu.vector_store %arg7[%c0_15, %c0_16], %29 {strides = array<i32>} : memref<4x1xf32, #tpu.memory_space<vmem>>, vector<4x1xf32>,
    %c0_17 = arith.constant 0 : index
    %c0_18 = arith.constant 0 : index
    %31 = vector.load %arg5[%c0_17, %c0_18] : memref<4x1xf32, #tpu.memory_space<vmem>>, vector<4x1xf32>
    tpu.vector_store %arg5[%c0_17, %c0_18], %10 {strides = array<i32>} : memref<4x1xf32, #tpu.memory_space<vmem>>, vector<4x1xf32>,
    %c0_i32_19 = arith.constant 0 : i32
    %32 = arith.cmpi eq, %arg2, %c0_i32_19 : i32
    %33 = arith.extui %32 : i1 to i32
    %c0_i32_20 = arith.constant 0 : i32
    %34 = arith.cmpi ne, %33, %c0_i32_20 : i32
    scf.if %34 {
      %c0_21 = arith.constant 0 : index
      %c0_22 = arith.constant 0 : index
      %35 = vector.load %arg6[%c0_21, %c0_22] : memref<4x1xf32, #tpu.memory_space<vmem>>, vector<4x1xf32>
      %c0_23 = arith.constant 0 : index
      %c0_24 = arith.constant 0 : index
      %36 = vector.load %arg7[%c0_23, %c0_24] : memref<4x1xf32, #tpu.memory_space<vmem>>, vector<4x1xf32>
      %37 = arith.divf %35, %36 : vector<4x1xf32>
      %c0_25 = arith.constant 0 : index
      %c0_26 = arith.constant 0 : index
      %c0_27 = arith.constant 0 : index
      %38 = vector.load %arg4[%c0_25, %c0_26, %c0_27] : memref<1x4x1xf32, #tpu.memory_space<vmem>>, vector<1x4x1xf32>
      %39 = vector.shape_cast %38 : vector<1x4x1xf32> to vector<4x1xf32>
      %40 = vector.shape_cast %37 : vector<4x1xf32> to vector<1x4x1xf32>
      tpu.vector_store %arg4[%c0_25, %c0_26, %c0_27], %40 {strides = array<i32>} : memref<1x4x1xf32, #tpu.memory_space<vmem>>, vector<1x4x1xf32>,
    } else {
    }
    return
  }
  func.func @transform_0(%arg0: i32, %arg1: i32, %arg2: i32) -> (i32, i32, i32) {
    %c0_i32 = arith.constant 0 : i32
    return %arg0, %arg1, %arg2 : i32, i32, i32
  }
  func.func @transform_1(%arg0: i32, %arg1: i32, %arg2: i32) -> (i32, i32, i32) {
    %c0_i32 = arith.constant 0 : i32
    %c0_i32_0 = arith.constant 0 : i32
    return %arg0, %arg1, %c0_i32 : i32, i32, i32
  }
}

</mosaic_0001>

<llo_original>
// kernel: tpu_custom_call.1
$region0: #{tpu_custom_call.1}
  #allocation0 [shape = 'u32[]', space=smem, size = 0x4, offset = 0x4, fixed_abs, tag = 'smem constant byte address 0x4 - core index']
  #allocation1 [shape = 'u32[144,128]{1,0:T(1,128)}', space=vmem, size = 0x12000, scoped, tag = 'internal scratch']
  #allocation2 [shape = 'f32[4,1]{1,0:T(4,128)}', space=vmem, size = 0x800, scoped, tag = 'scratch operand']
  #allocation3 [shape = 'f32[4,1]{1,0:T(4,128)}', space=vmem, size = 0x800, scoped, tag = 'scratch operand']
  #allocation4 [shape = 'f32[4,1]{1,0:T(4,128)}', space=vmem, size = 0x800, scoped, tag = 'scratch operand']
  %s0 = inlined_call_operand.hbm [shape: f32[2,4,256], index: 0, kind: input, shape index: {}]
  %s1 = inlined_call_operand.vmem [shape: f32[2,4,1], index: 1, kind: output, shape index: {}]
  %s2 = sld [smem:[#allocation0]]
  $region49: #{tpu_custom_call.1} parent=0
    _
  %s4 = ssub.s32 1, %s2
  %s5 = scalar_select 0, %s4, %s2
  $region1: #{tpu_custom_call.1} parent=0
    #allocation5 [shape = 'u8[8192]{0}', space=vmem, size = 0x2000, scoped, tag = 'input window, operand 0']
    #allocation6 [shape = 's32[2]{0}', space=sflag, size = 0x8, scoped, tag = 'scoped memory for tpu_custom_call.1']
    %6 = vsyncpa [#allocation6], 0
    %s7 = scalar_lea.sflag [#allocation6], 1
    %8 = vsyncpa %s7, 0
    loop: start=0, step=1, limit=4
    $region2: #{tpu_custom_call.1} parent=1 // loop_pre_header
      _
    $region3: #{tpu_custom_call.1} parent=1 // loop_header
      %s10 = sphi 0, %s14
      %p11 = scmp.ge.s32.totalorder %s10, 4
      %s17 = sphi 0, %s36
      %s18 = sphi 0, %s32
      %s19 = sphi 0, %s28
      %s20 = sphi 0, %s17
      %s21 = sphi 0, %s18
      %s22 = sphi 0, %s19
      %s23 = sphi 0, %s20
      %s24 = sphi 0, %s21
      %s25 = sphi 0, %s22
      %s43 = sphi 0, %s45
      %s46 = sphi 0, %s43
      %s47 = sphi 0, %s46
      %s63 = sphi 0, %s47
      %s71 = sphi 0, %s73
      %s74 = sphi 0, %s71
      %s75 = sphi 0, %s74
      %s91 = sphi 0, %s75
    $region4: #{tpu_custom_call.1} parent=1 // loop_header_branch
      %13 = sbr.rel (%p11) target = $region8
    $region5: #{tpu_custom_call.1} parent=1 // loop_body
      %s15 = ssub.s32 %s10, 1
      %s16 = ssub.s32 %s10, 2
      %s26 = sadd.s32 1, %s19
      %p27 = scmp.ge.s32.totalorder %s26, 1
      %s28 = scalar_select %p27, 0, %s26
      %s29 = sadd.s32 1, %s18
      %s30 = scalar_select %p27, %s29, %s18
      %p31 = scmp.ge.s32.totalorder %s30, 1
      %s32 = scalar_select %p31, 0, %s30
      %s33 = sadd.s32 1, %s17
      %s34 = scalar_select %p31, %s33, %s17
      %p35 = scmp.ge.s32.totalorder %s34, 2
      %s36 = scalar_select %p35, 0, %s34
      %s37 = ssub.s32 %s17, %s36
      %s38 = ssub.s32 %s18, %s32
      %s39 = sor.u32 %s37, %s38
      %s40 = ssub.s32 %s19, %s28
      %s41 = sor.u32 %s39, %s40
      %p42 = scmp.eq.s32.totalorder %s41, 0
      %s44 = sadd.s32 %s43, 1
      %s45 = scalar_select %p42, %s43, %s44
      %p48 = pneg %p42
      %p49 = scmp.eq.s32.totalorder %s10, 1
      %p50 = por %p48, %p49
      %p51 = scmp.ne.s32.totalorder %s43, %s46
      %p52 = scmp.eq.s32.totalorder %s10, 0
      %p53 = por %p51, %p52
      %p54 = scmp.ne.s32.totalorder %s43, %s46
      %p55 = scmp.eq.s32.totalorder %s15, 1
      %p56 = por %p54, %p55
      %p57 = scmp.ne.s32.totalorder %s46, %s47
      %p58 = scmp.eq.s32.totalorder %s15, 0
      %p59 = por %p57, %p58
      %p60 = scmp.ne.s32.totalorder %s46, %s47
      %p61 = scmp.eq.s32.totalorder %s16, 1
      %p62 = por %p60, %p61
      %p64 = scmp.ne.s32.totalorder %s47, %s63
      %p65 = scmp.eq.s32.totalorder %s16, 0
      %p66 = por %p64, %p65
      %s67 = ssub.s32 %s17, %s36
      %s68 = ssub.s32 %s18, %s32
      %s69 = sor.u32 %s67, %s68
      %p70 = scmp.eq.s32.totalorder %s69, 0
      %s72 = sadd.s32 %s71, 1
      %s73 = scalar_select %p70, %s71, %s72
      %p76 = pneg %p70
      %p77 = scmp.eq.s32.totalorder %s10, 1
      %p78 = por %p76, %p77
      %p79 = scmp.ne.s32.totalorder %s71, %s74
      %p80 = scmp.eq.s32.totalorder %s10, 0
      %p81 = por %p79, %p80
      %p82 = scmp.ne.s32.totalorder %s71, %s74
      %p83 = scmp.eq.s32.totalorder %s15, 1
      %p84 = por %p82, %p83
      %p85 = scmp.ne.s32.totalorder %s74, %s75
      %p86 = scmp.eq.s32.totalorder %s15, 0
      %p87 = por %p85, %p86
      %p88 = scmp.ne.s32.totalorder %s74, %s75
      %p89 = scmp.eq.s32.totalorder %s16, 1
      %p90 = por %p88, %p89
      %p92 = scmp.ne.s32.totalorder %s75, %s91
      %p93 = scmp.eq.s32.totalorder %s16, 0
      %p94 = por %p92, %p93
      %p95 = scmp.le.s32.totalorder 1, %s10
      %p96 = scmp.lt.s32.totalorder %s10, 3
      %p97 = pnand %p95, %p96
      %p98 = pneg %p97
      // Predicated region
      $region9: #{tpu_custom_call.1} parent=5 // pred_check
        _
      $region10: #{tpu_custom_call.1} parent=5 // pred_check_branch
        %100 = sbr.rel (%p97) target = $region12
      $region11: #{tpu_custom_call.1} parent=5 // pred_region
        %s101 = ssub.s32 %s10, 1
      $region12: #{tpu_custom_call.1} parent=5 // pred_fallthru
        _
      %p102 = scmp.lt.s32.totalorder %s10, 2
      // Predicated region
      $region13: #{tpu_custom_call.1} parent=5 // pred_check
        %p103 = pneg %p102
      $region14: #{tpu_custom_call.1} parent=5 // pred_check_branch
        %105 = sbr.rel (%p103) target = $region16
      $region15: #{tpu_custom_call.1} parent=5 // pred_region
        // Predicated region
        $region17: #{tpu_custom_call.1} parent=15 // pred_check
          %p106 = pneg %p53
        $region18: #{tpu_custom_call.1} parent=15 // pred_check_branch
          %108 = sbr.rel (%p106) target = $region20
        $region19: #{tpu_custom_call.1} parent=15 // pred_region
          %s109 = sand.u32 %s43, 1
          %s110 = scalar_lea.sflag [#allocation6], %s109
          %s111 = sand.u32 %s43, 1
          %s112 = smul.addr %s111, 8
          %s113 = scalar_lea.vmem [#allocation5], %s112
          %s114 = smul.u32 2, %s19
          %s116 = ssub.s32 128, 128
          %117 = vsyncadd %s110, %s116
          %s118 = smul.addr %s18, 2
          %s119 = sadd.s32 %s114, %s118
          %s120 = smul.addr %s17, 2
          %s121 = sadd.s32 %s119, %s120
          %s122 = smul.addr %s121, 64
          %s123 = scalar_lea.hbm %s0, %s122
          %s125 = sshll.u32 %s113, 4
          %s126 = int_to_ptr.vmem [resolvable:$true] %s125
          %128 = dma.hbm_to_vmem [thread:$0]  %s123, 128, %s126, %s110
        $region20: #{tpu_custom_call.1} parent=15 // pred_fallthru
          _
      $region16: #{tpu_custom_call.1} parent=5 // pred_fallthru
        _
      %p129 = scmp.le.s32.totalorder 1, %s10
      %p130 = scmp.lt.s32.totalorder %s10, 3
      %p131 = pnand %p129, %p130
      %p132 = pneg %p131
      // Predicated region
      $region21: #{tpu_custom_call.1} parent=5 // pred_check
        _
      $region22: #{tpu_custom_call.1} parent=5 // pred_check_branch
        %134 = sbr.rel (%p131) target = $region24
      $region23: #{tpu_custom_call.1} parent=5 // pred_region
        %s135 = ssub.s32 %s10, 1
        %s136 = sand.u32 %s46, 1
        %s137 = scalar_lea.sflag [#allocation6], %s136
        %s138 = sand.u32 %s46, 1
        %s139 = smul.addr %s138, 8
        %s140 = scalar_lea.vmem [#allocation5], %s139
        // Predicated region
        $region25: #{tpu_custom_call.1} parent=23 // pred_check
          %p141 = pneg %p59
        $region26: #{tpu_custom_call.1} parent=23 // pred_check_branch
          %143 = sbr.rel (%p141) target = $region28
        $region27: #{tpu_custom_call.1} parent=23 // pred_region
          %144 = dma.done %s137, 128
        $region28: #{tpu_custom_call.1} parent=23 // pred_fallthru
          _
        %s145 = sand.u32 %s46, 1
        %s146 = scalar_lea.sflag [#allocation6], %s145
        %s147 = sand.u32 %s46, 1
        %s148 = smul.addr %s147, 8
        %s149 = scalar_lea.vmem [#allocation5], %s148
        %p150 = pneg %p59
        %p151 = pneg %p56
        %p152 = pneg %p87
        %p153 = pneg %p84
        %p154 = scmp.lt.s32.totalorder %s20, 1
        %s155 = scalar_select %p154, %s20, 1
        %p156 = scmp.lt.s32.totalorder %s21, 0
        %s157 = scalar_select %p156, %s21, 0
        %s158 = sadd.s32 %s157, %s155
        %s159 = smul.addr %s158, 4
        %s160 = scalar_lea.vmem %s1, %s159
        %s161 = smul.u32 2, %s22
        %p162 = scmp.lt.s32.totalorder %s20, 1
        %s163 = scalar_select %p162, %s20, 1
        %p164 = scmp.lt.s32.totalorder %s21, 0
        %s165 = scalar_select %p164, %s21, 0
        %s166 = sadd.s32 %s165, %s163
        %s167 = smul.addr %s166, 4
        %s168 = scalar_lea.vmem %s1, %s167
        %p169 = scmp.eq.s32.totalorder %s22, 0
        // Predicated region
        $region29: #{tpu_custom_call.1} parent=23 // pred_check
          %p170 = pneg %p169
        $region30: #{tpu_custom_call.1} parent=23 // pred_check_branch
          %172 = sbr.rel (%p170) target = $region32
        $region31: #{tpu_custom_call.1} parent=23 // pred_region
          %vm173 = vcmask 3072
          %174 = vst.msk [vmem:[#allocation2] sm:$0xf] %vm173, -inf
          %175 = vst.msk [vmem:[#allocation3] sm:$0xf] %vm173, 0.0
          %176 = vst.msk [vmem:[#allocation4] sm:$0xf] %vm173, 0.0
        $region32: #{tpu_custom_call.1} parent=23 // pred_fallthru
          _
        %v177 = vld [vmem:[%s140] sm:$0xff]
        %v179 = vcombine.high %v177, %v177
        %vm181 = vcmask 1043456
        %v182 = vsel %vm181, %v177, -inf
        %v183 = vsel %vm181, %v179, -inf
        %v184 = vmax.f32 %v182, %v183
        %185 = vmax.xlane.f32.xlu0 %v184
        %v186 = vpop.xlane.xlu0 %185
        %v187 = vld [vmem:[#allocation2] sm:$0xf]
        %v188 = vmax.f32 %v187, %v186
        %v189 = vsub.f32 %v187, %v188
        %v190 = vmul.f32 %v189, 1.442695
        %v191 = vpow.pop %v190
        %193 = vset.pattern.permute.xlu0 0
        %194 = vperm.xlu0 %193, %v188
        %v195 = vpop.permute.xlu0 %194
        %v197 = vunpack.c.l.s4 839922192
        %v198 = vunpack.c.0.s8 %v197
        %v199 = vlaneseq
        %v200 = vshrl.u32 %v199, 7
        %v201 = vsub.s32 %v198, %v200
        %v202 = vrot.slane %v195, %v201
        %v204 = vsub.f32 %v177, %v202
        %v205 = vmul.f32 %v204, 1.442695
        %v206 = vpow.pop %v205
        %v207 = vld [vmem:[#allocation3] sm:$0xf]
        %v208 = vmul.f32 %v191, %v207
        %v209 = vmul.f32 %v177, %v206
        %v211 = vcombine.high %v209, %v209
        %v213 = vsel %vm181, %v209, 0.0
        %v214 = vsel %vm181, %v211, 0.0
        %v215 = vadd.f32 %v213, %v214
        %216 = vadd.xlane.f32.xlu0 %v215
        %v217 = vpop.xlane.xlu0 %216
        %v218 = vadd.f32 %v208, %v217
        %vm219 = vcmask 3072
        %220 = vst.msk [vmem:[#allocation3] sm:$0xf] %vm219, %v218
        %v221 = vld [vmem:[#allocation4] sm:$0xf]
        %v222 = vmul.f32 %v191, %v221
        %v224 = vcombine.high %v206, %v206
        %v226 = vsel %vm181, %v206, 0.0
        %v227 = vsel %vm181, %v224, 0.0
        %v228 = vadd.f32 %v226, %v227
        %229 = vadd.xlane.f32.xlu0 %v228
        %v230 = vpop.xlane.xlu0 %229
        %v231 = vadd.f32 %v222, %v230
        %232 = vst.msk [vmem:[#allocation4] sm:$0xf] %vm219, %v231
        %233 = vst.msk [vmem:[#allocation2] sm:$0xf] %vm219, %v188
        // Predicated region
        $region33: #{tpu_custom_call.1} parent=23 // pred_check
          %p234 = pneg %p169
        $region34: #{tpu_custom_call.1} parent=23 // pred_check_branch
          %236 = sbr.rel (%p234) target = $region36
        $region35: #{tpu_custom_call.1} parent=23 // pred_region
          %v237 = vld [vmem:[#allocation3] sm:$0xf]
          %v238 = vld [vmem:[#allocation4] sm:$0xf]
          %v239 = vrcp.pop %v238
          %v240 = vmul.f32 %v237, %v239
          %241 = vst.msk [vmem:[%s168] sm:$0xf] %vm219, %v240
        $region36: #{tpu_custom_call.1} parent=23 // pred_fallthru
          _
        %p242 = scmp.lt.s32.totalorder %s20, 1
        %s243 = scalar_select %p242, %s20, 1
        %p244 = scmp.lt.s32.totalorder %s21, 0
        %s245 = scalar_select %p244, %s21, 0
        %s246 = sadd.s32 %s245, %s243
        %s247 = smul.addr %s246, 4
        %s248 = scalar_lea.vmem %s1, %s247
        // Predicated region
        $region37: #{tpu_custom_call.1} parent=23 // pred_check
          %p249 = pneg %p84
        $region38: #{tpu_custom_call.1} parent=23 // pred_check_branch
          %251 = sbr.rel (%p249) target = $region40
        $region39: #{tpu_custom_call.1} parent=23 // pred_region
          _
        $region40: #{tpu_custom_call.1} parent=23 // pred_fallthru
          _
      $region24: #{tpu_custom_call.1} parent=5 // pred_fallthru
        _
      %p252 = scmp.le.s32.totalorder 2, %s10
      // Predicated region
      $region41: #{tpu_custom_call.1} parent=5 // pred_check
        %p253 = pneg %p252
      $region42: #{tpu_custom_call.1} parent=5 // pred_check_branch
        %255 = sbr.rel (%p253) target = $region44
      $region43: #{tpu_custom_call.1} parent=5 // pred_region
        %s256 = ssub.s32 %s10, 2
        // Predicated region
        $region45: #{tpu_custom_call.1} parent=43 // pred_check
          %p257 = pneg %p90
        $region46: #{tpu_custom_call.1} parent=43 // pred_check_branch
          %259 = sbr.rel (%p257) target = $region48
        $region47: #{tpu_custom_call.1} parent=43 // pred_region
          %p260 = scmp.lt.s32.totalorder %s23, 1
          %s261 = scalar_select %p260, %s23, 1
          %p262 = scmp.lt.s32.totalorder %s24, 0
          %s263 = scalar_select %p262, %s24, 0
          %s264 = sadd.s32 %s263, %s261
          %s265 = smul.addr %s264, 4
          %s266 = scalar_lea.vmem %s1, %s265
        $region48: #{tpu_custom_call.1} parent=43 // pred_fallthru
          _
      $region44: #{tpu_custom_call.1} parent=5 // pred_fallthru
        _
    $region6: #{tpu_custom_call.1} parent=1 // loop_footer
      %s14 = sadd.s32 1, %s10
    $region7: #{tpu_custom_call.1} parent=1 // loop_footer_branch
      %9 = sbr.rel target = $region3
    $region8: #{tpu_custom_call.1} parent=1 // loop_exit
      _
    %267 = vsyncpa [#allocation6], 1
    %s268 = scalar_lea.sflag [#allocation6], 1
    %269 = vsyncpa %s268, 1

</llo_original>
